<compile_context>
chip_gen: v5e
topology: v5e:2x2
jax: 0.10.0
libtpu: 0.0.40
codegen_flags: <defaults>
</compile_context>

<pallas_src>
import functools

import jax
import jax.numpy as jnp
from jax.experimental import pallas as pl
from jax.experimental.pallas import tpu as pltpu

OUT_NAMES = (
    "loss_answer_type", "accuracy_answer_type",
    "loss_answer_binary", "accuracy_answer_binary",
    "loss_answer_reg", "accuracy_answer_reg",
    "loss_answer_attr", "accuracy_answer_attr",
    "accuracy_answer_total",
)

_LANE = 128
_NUM_PARTIALS = 12


def _clever_kernel(pt_ref, pr_ref, pa_ref, flt_ref, int_ref, out_ref, acc_ref,
                   *, batch_size, block_b):
    """One batch tile: per-sample losses/flags -> fused partial sums -> finalize."""
    step = pl.program_id(0)

    @pl.when(step == 0)
    def _init():
        acc_ref[...] = jnp.zeros_like(acc_ref)

    # Load in native dtype, cast to f32 in-kernel (keeps HBM traffic narrow;
    # f32 math is required on v5e anyway).
    logits_t = pt_ref[...].astype(jnp.float32)      # [C_TYPE, TB]
    logits_r = pr_ref[...].astype(jnp.float32)      # [C_REG,  TB]
    logits_a = pa_ref[...].astype(jnp.float32)      # [C_ATTR, TB]
    x_bin = flt_ref[0:1, :].astype(jnp.float32)     # [1, TB] binary logits
    y_bin = flt_ref[1:2, :].astype(jnp.float32)     # [1, TB] binary targets (0/1)
    t_lab = int_ref[0:1, :]                         # [1, TB] i32 answer_type
    r_lab = int_ref[1:2, :]                         # [1, TB] i32 answer_reg
    a_lab = int_ref[2:3, :]                         # [1, TB] i32 answer_attr

    tb = logits_t.shape[1]

    # Mask for padded batch tail.
    lane = jax.lax.broadcasted_iota(jnp.int32, (1, tb), 1)
    valid = ((step * block_b + lane) < batch_size).astype(jnp.float32)  # [1, TB]

    def ce_and_acc(logits, labels):
        """Per-sample softmax CE and argmax-correct flag, both [1, TB]."""
        c = logits.shape[0]
        m = jnp.max(logits, axis=0, keepdims=True)                       # [1, TB]
        lse = m + jnp.log(jnp.sum(jnp.exp(logits - m), axis=0, keepdims=True))
        cls = jax.lax.broadcasted_iota(jnp.int32, (c, tb), 0)
        onehot = (cls == labels).astype(jnp.float32)
        label_logit = jnp.sum(logits * onehot, axis=0, keepdims=True)
        ce = lse - label_logit
        # First-max argmax (matches torch.argmax tie-breaking).
        idx_if_max = jnp.where(logits >= m, cls, jnp.int32(c))
        amax = jnp.min(idx_if_max, axis=0, keepdims=True)
        ok = (amax == labels).astype(jnp.float32)
        return ce, ok

    ce_t, ok_t = ce_and_acc(logits_t, t_lab)
    ce_r, ok_r = ce_and_acc(logits_r, r_lab)
    ce_a, ok_a = ce_and_acc(logits_a, a_lab)

    is_bin = (t_lab == 0).astype(jnp.float32) * valid
    is_attr = (t_lab == 1).astype(jnp.float32) * valid
    is_reg = (t_lab == 2).astype(jnp.float32) * valid

    # binary_cross_entropy_with_logits, reduction='none' (numerically stable).
    # log1p(t) via the exact Goldberg identity (avoids precision loss of
    # log(1+t) for tiny t without relying on a native log1p lowering).
    t = jnp.exp(-jnp.abs(x_bin))
    u = 1.0 + t
    um1 = u - 1.0
    safe_um1 = jnp.where(um1 == 0.0, 1.0, um1)
    log1p_t = jnp.where(um1 == 0.0, t, jnp.log(u) * (t / safe_um1))
    bce = jnp.maximum(x_bin, 0.0) - x_bin * y_bin + log1p_t
    ok_bin = ((x_bin > 0.0).astype(jnp.float32) == y_bin).astype(jnp.float32)

    # Fuse all batch reductions: one [12, TB] tile accumulated per step (pure VPU);
    # the single lane reduce happens once in the finalize block.
    stacked = jnp.concatenate([
        ce_t * valid,                                                   # 0 sum CE(type)
        ok_t * valid,                                                   # 1 sum acc(type)
        is_bin,                                                         # 2 n_binary
        is_reg,                                                         # 3 n_reg
        is_attr,                                                        # 4 n_attr
        bce * is_bin,                                                   # 5 sum BCE|binary
        ok_bin * is_bin,                                                # 6 sum acc|binary
        ce_r * is_reg,                                                  # 7 sum CE|reg
        ok_r * is_reg,                                                  # 8 sum acc|reg
        ce_a * is_attr,                                                 # 9 sum CE|attr
        ok_a * is_attr,                                                 # 10 sum acc|attr
        ok_t * (is_bin * ok_bin + is_reg * ok_r + is_attr * ok_a),      # 11 total acc
    ], axis=0)                                                          # [12, TB]

    acc_ref[...] += stacked

    @pl.when(step == pl.num_programs(0) - 1)
    def _finalize():
        sums = jnp.sum(acc_ref[...], axis=1, keepdims=True)             # [12, 1]

        def s(k):
            return sums[k:k + 1, 0:1]

        inv_b = jnp.float32(1.0 / batch_size)
        one = jnp.ones((1, 1), jnp.float32)
        nb, nr, na = s(2), s(3), s(4)
        nb_s = jnp.where(nb > 0.0, nb, one)
        nr_s = jnp.where(nr > 0.0, nr, one)
        na_s = jnp.where(na > 0.0, na, one)

        row = jnp.concatenate([
            s(0) * inv_b,                                   # loss_answer_type
            s(1) * inv_b,                                   # accuracy_answer_type
            s(5) / nb_s,                                    # loss_answer_binary
            jnp.where(nb > 0.0, s(6) / nb_s, one),          # accuracy_answer_binary
            s(7) / nr_s,                                    # loss_answer_reg
            jnp.where(nr > 0.0, s(8) / nr_s, one),          # accuracy_answer_reg
            s(9) / na_s,                                    # loss_answer_attr
            jnp.where(na > 0.0, s(10) / na_s, one),         # accuracy_answer_attr
            s(11) * inv_b,                                  # accuracy_answer_total
        ], axis=1)                                          # [1, 9]
        out_ref[...] = row


def qa_criterion_clever(output, answers, *, block_b_max=1024):
    """Pallas-backed equivalent of QACriterionClever.forward."""
    pt = output["pred_answer_type"]      # [B, C_TYPE], native dtype
    pb = output["pred_answer_binary"]    # [B]
    pr = output["pred_answer_reg"]       # [B, C_REG]
    pa = output["pred_answer_attr"]      # [B, C_ATTR]
    at = answers["answer_type"]          # [B] int
    ab = answers["answer_binary"]        # [B] float 0/1
    ar = answers["answer_reg"]           # [B] int
    aa = answers["answer_attr"]          # [B] int

    b, c_type = pt.shape
    c_reg = pr.shape[1]
    c_attr = pa.shape[1]

    # Pad batch to a lane-dense multiple of 128 and pick a bounded tile
    # (block_b_max=1024 keeps double-buffered tiles far below v7x's 64 MiB VMEM).
    bp = max(_LANE, ((b + _LANE - 1) // _LANE) * _LANE)
    tb = min(bp, block_b_max)
    bp = ((bp + tb - 1) // tb) * tb
    steps = bp // tb
    pad = bp - b

    def prep_logits(x):
        xt = jnp.transpose(x)                       # [C, B], keep native dtype
        if pad:
            xt = jnp.pad(xt, ((0, 0), (0, pad)))
        return xt

    pt_t = prep_logits(pt)
    pr_t = prep_logits(pr)
    pa_t = prep_logits(pa)

    # Pack the five per-sample vectors into two tiny [rows, B] arrays
    # (float: binary logit + target, int: the three labels).
    flt = jnp.stack([pb.reshape(-1).astype(jnp.float32),
                     ab.reshape(-1).astype(jnp.float32)], axis=0)        # [2, B]
    ints = jnp.stack([at.reshape(-1), ar.reshape(-1), aa.reshape(-1)],
                     axis=0).astype(jnp.int32)                           # [3, B]
    if pad:
        flt = jnp.pad(flt, ((0, 0), (0, pad)))
        ints = jnp.pad(ints, ((0, 0), (0, pad)))

    kernel = functools.partial(_clever_kernel, batch_size=b, block_b=tb)

    # NOTE: the single grid axis is a reduction into one accumulator, hence
    # "arbitrary"; a v7x 2-TensorCore split would add a leading "parallel"
    # axis with per-core partial sums finalized in the wrapper.
    out = pl.pallas_call(
        kernel,
        out_shape=jax.ShapeDtypeStruct((1, 9), jnp.float32),
        grid_spec=pltpu.PrefetchScalarGridSpec(
            num_scalar_prefetch=0,
            grid=(steps,),
            in_specs=[
                pl.BlockSpec((c_type, tb), lambda i: (0, i)),
                pl.BlockSpec((c_reg, tb), lambda i: (0, i)),
                pl.BlockSpec((c_attr, tb), lambda i: (0, i)),
                pl.BlockSpec((2, tb), lambda i: (0, i)),
                pl.BlockSpec((3, tb), lambda i: (0, i)),
            ],
            out_specs=pl.BlockSpec((1, 9), lambda i: (0, 0)),
            scratch_shapes=[pltpu.VMEM((_NUM_PARTIALS, tb), jnp.float32)],
        ),
        compiler_params=pltpu.CompilerParams(
            dimension_semantics=("arbitrary",)),
    )(pt_t, pr_t, pa_t, flt, ints)

    return {name: out[0, i] for i, name in enumerate(OUT_NAMES)}


def _reference(output, answers):
    """Pure-JAX mirror of the PyTorch forward (for verification)."""
    pt = output["pred_answer_type"].astype(jnp.float32)
    pb = output["pred_answer_binary"].astype(jnp.float32)
    pr = output["pred_answer_reg"].astype(jnp.float32)
    pa = output["pred_answer_attr"].astype(jnp.float32)
    at = answers["answer_type"].astype(jnp.int32)
    ab = answers["answer_binary"].astype(jnp.float32)
    ar = answers["answer_reg"].astype(jnp.int32)
    aa = answers["answer_attr"].astype(jnp.int32)
    b = pt.shape[0]

    def ce(logits, labels):
        lse = jax.nn.logsumexp(logits, axis=-1)
        return lse - jnp.take_along_axis(logits, labels[:, None], axis=-1)[:, 0]

    loss = {}
    loss["loss_answer_type"] = jnp.mean(ce(pt, at))
    type_acc = (jnp.argmax(pt, axis=-1) == at).astype(jnp.float32)
    loss["accuracy_answer_type"] = jnp.sum(type_acc) / b

    is_bin = (at == 0).astype(jnp.float32)
    is_attr = (at == 1).astype(jnp.float32)
    is_reg = (at == 2).astype(jnp.float32)
    nb, na, nr = jnp.sum(is_bin), jnp.sum(is_attr), jnp.sum(is_reg)

    bce = jnp.maximum(pb, 0.0) - pb * ab + jnp.log1p(jnp.exp(-jnp.abs(pb)))
    loss["loss_answer_binary"] = jnp.sum(bce * is_bin) / jnp.where(nb > 0, nb, 1.0)
    bin_acc = ((pb > 0.0).astype(jnp.float32) == ab).astype(jnp.float32)
    loss["accuracy_answer_binary"] = jnp.where(
        nb > 0, jnp.sum(bin_acc * is_bin) / jnp.where(nb > 0, nb, 1.0), 1.0)

    loss["loss_answer_reg"] = jnp.sum(ce(pr, ar) * is_reg) / jnp.where(nr > 0, nr, 1.0)
    reg_acc = (jnp.argmax(pr, axis=-1) == ar).astype(jnp.float32)
    loss["accuracy_answer_reg"] = jnp.where(
        nr > 0, jnp.sum(reg_acc * is_reg) / jnp.where(nr > 0, nr, 1.0), 1.0)

    loss["loss_answer_attr"] = jnp.sum(ce(pa, aa) * is_attr) / jnp.where(na > 0, na, 1.0)
    attr_acc = (jnp.argmax(pa, axis=-1) == aa).astype(jnp.float32)
    loss["accuracy_answer_attr"] = jnp.where(
        na > 0, jnp.sum(attr_acc * is_attr) / jnp.where(na > 0, na, 1.0), 1.0)

    loss["accuracy_answer_total"] = jnp.sum(
        type_acc * (is_bin * bin_acc + is_reg * reg_acc + is_attr * attr_acc)) / b
    return loss


if __name__ == "__main__":
    B, C_TYPE, C_REG, C_ATTR = 8, 3, 16, 16
    key = jax.random.PRNGKey(0)
    k = jax.random.split(key, 8)

    output = {
        "pred_answer_type": jax.random.normal(k[0], (B, C_TYPE), jnp.float32),
        "pred_answer_binary": jax.random.normal(k[1], (B,), jnp.float32),
        "pred_answer_reg": jax.random.normal(k[2], (B, C_REG), jnp.float32),
        "pred_answer_attr": jax.random.normal(k[3], (B, C_ATTR), jnp.float32),
    }
    answers = {
        "answer_type": jax.random.randint(k[4], (B,), 0, 3, jnp.int32),
        "answer_binary": jax.random.bernoulli(k[5], 0.5, (B,)).astype(jnp.float32),
        "answer_reg": jax.random.randint(k[6], (B,), 0, C_REG, jnp.int32),
        "answer_attr": jax.random.randint(k[7], (B,), 0, C_ATTR, jnp.int32),
    }

    result = qa_criterion_clever(output, answers)
    jax.block_until_ready(result)

    ref = _reference(output, answers)
    for name in OUT_NAMES:
        got = float(result[name])
        want = float(ref[name])
        assert abs(got - want) < 1e-4, f"{name}: kernel={got} ref={want}"

    print("KERNEL_OK")
</pallas_src>

<mosaic_0001>
module attributes {stable_mosaic.version = 11 : i64} {
  func.func @_clever_kernel(%arg0: i32, %arg1: memref<3x128xf32, #tpu.memory_space<vmem>>, %arg2: memref<16x128xf32, #tpu.memory_space<vmem>>, %arg3: memref<16x128xf32, #tpu.memory_space<vmem>>, %arg4: memref<2x128xf32, #tpu.memory_space<vmem>>, %arg5: memref<3x128xi32, #tpu.memory_space<vmem>>, %arg6: memref<1x9xf32, #tpu.memory_space<vmem>>, %arg7: memref<12x128xf32, #tpu.memory_space<vmem>>) attributes {dimension_semantics = [#tpu.dimension_semantics<arbitrary>], iteration_bounds = array<i64: 1>, scalar_prefetch = 0 : i64, scratch_operands = 1 : i64, tpu.core_type = #tpu.core_type<tc>, window_params = [{transform_indices = @transform_0, window_bounds = array<i64: 3, 128>}, {transform_indices = @transform_1, window_bounds = array<i64: 16, 128>}, {transform_indices = @transform_2, window_bounds = array<i64: 16, 128>}, {transform_indices = @transform_3, window_bounds = array<i64: 2, 128>}, {transform_indices = @transform_4, window_bounds = array<i64: 3, 128>}, {pipeline_mode = #tpu.pipeline_mode<synchronous>, transform_indices = @transform_5, window_bounds = array<i64: 1, 9>}]} {
    %c0_i32 = arith.constant 0 : i32
    %0 = arith.cmpi eq, %arg0, %c0_i32 : i32
    %1 = arith.extui %0 : i1 to i32
    %c0_i32_0 = arith.constant 0 : i32
    %2 = arith.cmpi ne, %1, %c0_i32_0 : i32
    scf.if %2 {
      %cst_41 = arith.constant 0.000000e+00 : f32
      %166 = vector.broadcast %cst_41 : f32 to vector<12x128xf32>
      %c0_42 = arith.constant 0 : index
      %c0_43 = arith.constant 0 : index
      %167 = vector.load %arg7[%c0_42, %c0_43] : memref<12x128xf32, #tpu.memory_space<vmem>>, vector<12x128xf32>
      tpu.vector_store %arg7[%c0_42, %c0_43], %166 {strides = array<i32>} : memref<12x128xf32, #tpu.memory_space<vmem>>, vector<12x128xf32>,
    } else {
    }
    %c0 = arith.constant 0 : index
    %c0_1 = arith.constant 0 : index
    %3 = vector.load %arg1[%c0, %c0_1] : memref<3x128xf32, #tpu.memory_space<vmem>>, vector<3x128xf32>
    %c0_2 = arith.constant 0 : index
    %c0_3 = arith.constant 0 : index
    %4 = vector.load %arg2[%c0_2, %c0_3] : memref<16x128xf32, #tpu.memory_space<vmem>>, vector<16x128xf32>
    %c0_4 = arith.constant 0 : index
    %c0_5 = arith.constant 0 : index
    %5 = vector.load %arg3[%c0_4, %c0_5] : memref<16x128xf32, #tpu.memory_space<vmem>>, vector<16x128xf32>
    %c0_6 = arith.constant 0 : index
    %c0_7 = arith.constant 0 : index
    %6 = vector.load %arg4[%c0_6, %c0_7] : memref<2x128xf32, #tpu.memory_space<vmem>>, vector<1x128xf32>
    %c1 = arith.constant 1 : index
    %c0_8 = arith.constant 0 : index
    %7 = vector.load %arg4[%c1, %c0_8] : memref<2x128xf32, #tpu.memory_space<vmem>>, vector<1x128xf32>
    %c0_9 = arith.constant 0 : index
    %c0_10 = arith.constant 0 : index
    %8 = vector.load %arg5[%c0_9, %c0_10] : memref<3x128xi32, #tpu.memory_space<vmem>>, vector<1x128xi32>
    %c1_11 = arith.constant 1 : index
    %c0_12 = arith.constant 0 : index
    %9 = vector.load %arg5[%c1_11, %c0_12] : memref<3x128xi32, #tpu.memory_space<vmem>>, vector<1x128xi32>
    %c2 = arith.constant 2 : index
    %c0_13 = arith.constant 0 : index
    %10 = vector.load %arg5[%c2, %c0_13] : memref<3x128xi32, #tpu.memory_space<vmem>>, vector<1x128xi32>
    %11 = tpu.iota {dimensions = array<i32: 1>} : vector<1x128xi32>
    %c128_i32 = arith.constant 128 : i32
    %12 = arith.muli %arg0, %c128_i32 : i32
    %13 = vector.broadcast %12 : i32 to vector<1x128xi32>
    %14 = arith.addi %13, %11 : vector<1x128xi32>
    %c8_i32 = arith.constant 8 : i32
    %15 = vector.broadcast %c8_i32 : i32 to vector<1x128xi32>
    %16 = arith.cmpi slt, %14, %15 : vector<1x128xi32>
    %17 = arith.extui %16 : vector<1x128xi1> to vector<1x128xi32>
    %18 = arith.sitofp %17 : vector<1x128xi32> to vector<1x128xf32>
    %cst = arith.constant dense<0xFF800000> : vector<128xf32>
    %19 = vector.multi_reduction <maximumf>, %3, %cst [0] : vector<3x128xf32> to vector<128xf32>
    %20 = vector.shape_cast %19 : vector<128xf32> to vector<1x128xf32>
    %21 = vector.broadcast %20 : vector<1x128xf32> to vector<3x128xf32>
    %22 = arith.subf %3, %21 : vector<3x128xf32>
    %23 = math.exp %22 : vector<3x128xf32>
    %cst_14 = arith.constant dense<0.000000e+00> : vector<128xf32>
    %24 = vector.multi_reduction <add>, %23, %cst_14 [0] : vector<3x128xf32> to vector<128xf32>
    %25 = vector.shape_cast %24 : vector<128xf32> to vector<1x128xf32>
    %26 = math.log %25 : vector<1x128xf32>
    %27 = arith.addf %20, %26 : vector<1x128xf32>
    %28 = tpu.iota {dimensions = array<i32: 0>} : vector<3x128xi32>
    %29 = vector.broadcast %8 : vector<1x128xi32> to vector<3x128xi32>
    %30 = arith.cmpi eq, %28, %29 : vector<3x128xi32>
    %31 = arith.extui %30 : vector<3x128xi1> to vector<3x128xi32>
    %32 = arith.sitofp %31 : vector<3x128xi32> to vector<3x128xf32>
    %33 = arith.mulf %3, %32 : vector<3x128xf32>
    %cst_15 = arith.constant dense<0.000000e+00> : vector<128xf32>
    %34 = vector.multi_reduction <add>, %33, %cst_15 [0] : vector<3x128xf32> to vector<128xf32>
    %35 = vector.shape_cast %34 : vector<128xf32> to vector<1x128xf32>
    %36 = arith.subf %27, %35 : vector<1x128xf32>
    %37 = vector.broadcast %20 : vector<1x128xf32> to vector<3x128xf32>
    %38 = arith.cmpf oge, %3, %37 : vector<3x128xf32>
    %c3_i32 = arith.constant 3 : i32
    %39 = vector.broadcast %c3_i32 : i32 to vector<3x128xi32>
    %40 = arith.select %38, %28, %39 : vector<3x128xi1>, vector<3x128xi32>
    %cst_16 = arith.constant dense<2147483647> : vector<128xi32>
    %41 = vector.multi_reduction <minsi>, %40, %cst_16 [0] : vector<3x128xi32> to vector<128xi32>
    %42 = vector.shape_cast %41 : vector<128xi32> to vector<1x128xi32>
    %43 = arith.cmpi eq, %42, %8 : vector<1x128xi32>
    %44 = arith.extui %43 : vector<1x128xi1> to vector<1x128xi32>
    %45 = arith.sitofp %44 : vector<1x128xi32> to vector<1x128xf32>
    %cst_17 = arith.constant dense<0xFF800000> : vector<128xf32>
    %46 = vector.multi_reduction <maximumf>, %4, %cst_17 [0] : vector<16x128xf32> to vector<128xf32>
    %47 = vector.shape_cast %46 : vector<128xf32> to vector<1x128xf32>
    %48 = vector.broadcast %47 : vector<1x128xf32> to vector<16x128xf32>
    %49 = arith.subf %4, %48 : vector<16x128xf32>
    %50 = math.exp %49 : vector<16x128xf32>
    %cst_18 = arith.constant dense<0.000000e+00> : vector<128xf32>
    %51 = vector.multi_reduction <add>, %50, %cst_18 [0] : vector<16x128xf32> to vector<128xf32>
    %52 = vector.shape_cast %51 : vector<128xf32> to vector<1x128xf32>
    %53 = math.log %52 : vector<1x128xf32>
    %54 = arith.addf %47, %53 : vector<1x128xf32>
    %55 = tpu.iota {dimensions = array<i32: 0>} : vector<16x128xi32>
    %56 = vector.broadcast %9 : vector<1x128xi32> to vector<16x128xi32>
    %57 = arith.cmpi eq, %55, %56 : vector<16x128xi32>
    %58 = arith.extui %57 : vector<16x128xi1> to vector<16x128xi32>
    %59 = arith.sitofp %58 : vector<16x128xi32> to vector<16x128xf32>
    %60 = arith.mulf %4, %59 : vector<16x128xf32>
    %cst_19 = arith.constant dense<0.000000e+00> : vector<128xf32>
    %61 = vector.multi_reduction <add>, %60, %cst_19 [0] : vector<16x128xf32> to vector<128xf32>
    %62 = vector.shape_cast %61 : vector<128xf32> to vector<1x128xf32>
    %63 = arith.subf %54, %62 : vector<1x128xf32>
    %64 = vector.broadcast %47 : vector<1x128xf32> to vector<16x128xf32>
    %65 = arith.cmpf oge, %4, %64 : vector<16x128xf32>
    %c16_i32 = arith.constant 16 : i32
    %66 = vector.broadcast %c16_i32 : i32 to vector<16x128xi32>
    %67 = arith.select %65, %55, %66 : vector<16x128xi1>, vector<16x128xi32>
    %cst_20 = arith.constant dense<2147483647> : vector<128xi32>
    %68 = vector.multi_reduction <minsi>, %67, %cst_20 [0] : vector<16x128xi32> to vector<128xi32>
    %69 = vector.shape_cast %68 : vector<128xi32> to vector<1x128xi32>
    %70 = arith.cmpi eq, %69, %9 : vector<1x128xi32>
    %71 = arith.extui %70 : vector<1x128xi1> to vector<1x128xi32>
    %72 = arith.sitofp %71 : vector<1x128xi32> to vector<1x128xf32>
    %cst_21 = arith.constant dense<0xFF800000> : vector<128xf32>
    %73 = vector.multi_reduction <maximumf>, %5, %cst_21 [0] : vector<16x128xf32> to vector<128xf32>
    %74 = vector.shape_cast %73 : vector<128xf32> to vector<1x128xf32>
    %75 = vector.broadcast %74 : vector<1x128xf32> to vector<16x128xf32>
    %76 = arith.subf %5, %75 : vector<16x128xf32>
    %77 = math.exp %76 : vector<16x128xf32>
    %cst_22 = arith.constant dense<0.000000e+00> : vector<128xf32>
    %78 = vector.multi_reduction <add>, %77, %cst_22 [0] : vector<16x128xf32> to vector<128xf32>
    %79 = vector.shape_cast %78 : vector<128xf32> to vector<1x128xf32>
    %80 = math.log %79 : vector<1x128xf32>
    %81 = arith.addf %74, %80 : vector<1x128xf32>
    %82 = tpu.iota {dimensions = array<i32: 0>} : vector<16x128xi32>
    %83 = vector.broadcast %10 : vector<1x128xi32> to vector<16x128xi32>
    %84 = arith.cmpi eq, %82, %83 : vector<16x128xi32>
    %85 = arith.extui %84 : vector<16x128xi1> to vector<16x128xi32>
    %86 = arith.sitofp %85 : vector<16x128xi32> to vector<16x128xf32>
    %87 = arith.mulf %5, %86 : vector<16x128xf32>
    %cst_23 = arith.constant dense<0.000000e+00> : vector<128xf32>
    %88 = vector.multi_reduction <add>, %87, %cst_23 [0] : vector<16x128xf32> to vector<128xf32>
    %89 = vector.shape_cast %88 : vector<128xf32> to vector<1x128xf32>
    %90 = arith.subf %81, %89 : vector<1x128xf32>
    %91 = vector.broadcast %74 : vector<1x128xf32> to vector<16x128xf32>
    %92 = arith.cmpf oge, %5, %91 : vector<16x128xf32>
    %c16_i32_24 = arith.constant 16 : i32
    %93 = vector.broadcast %c16_i32_24 : i32 to vector<16x128xi32>
    %94 = arith.select %92, %82, %93 : vector<16x128xi1>, vector<16x128xi32>
    %cst_25 = arith.constant dense<2147483647> : vector<128xi32>
    %95 = vector.multi_reduction <minsi>, %94, %cst_25 [0] : vector<16x128xi32> to vector<128xi32>
    %96 = vector.shape_cast %95 : vector<128xi32> to vector<1x128xi32>
    %97 = arith.cmpi eq, %96, %10 : vector<1x128xi32>
    %98 = arith.extui %97 : vector<1x128xi1> to vector<1x128xi32>
    %99 = arith.sitofp %98 : vector<1x128xi32> to vector<1x128xf32>
    %c0_i32_26 = arith.constant 0 : i32
    %100 = vector.broadcast %c0_i32_26 : i32 to vector<1x128xi32>
    %101 = arith.cmpi eq, %8, %100 : vector<1x128xi32>
    %102 = arith.extui %101 : vector<1x128xi1> to vector<1x128xi32>
    %103 = arith.sitofp %102 : vector<1x128xi32> to vector<1x128xf32>
    %104 = arith.mulf %103, %18 : vector<1x128xf32>
    %c1_i32 = arith.constant 1 : i32
    %105 = vector.broadcast %c1_i32 : i32 to vector<1x128xi32>
    %106 = arith.cmpi eq, %8, %105 : vector<1x128xi32>
    %107 = arith.extui %106 : vector<1x128xi1> to vector<1x128xi32>
    %108 = arith.sitofp %107 : vector<1x128xi32> to vector<1x128xf32>
    %109 = arith.mulf %108, %18 : vector<1x128xf32>
    %c2_i32 = arith.constant 2 : i32
    %110 = vector.broadcast %c2_i32 : i32 to vector<1x128xi32>
    %111 = arith.cmpi eq, %8, %110 : vector<1x128xi32>
    %112 = arith.extui %111 : vector<1x128xi1> to vector<1x128xi32>
    %113 = arith.sitofp %112 : vector<1x128xi32> to vector<1x128xf32>
    %114 = arith.mulf %113, %18 : vector<1x128xf32>
    %115 = math.absf %6 : vector<1x128xf32>
    %cst_27 = arith.constant 0.000000e+00 : f32
    %116 = vector.broadcast %cst_27 : f32 to vector<1x128xf32>
    %117 = arith.subf %116, %115 : vector<1x128xf32>
    %118 = math.exp %117 : vector<1x128xf32>
    %cst_28 = arith.constant 1.000000e+00 : f32
    %119 = vector.broadcast %cst_28 : f32 to vector<1x128xf32>
    %120 = arith.addf %119, %118 : vector<1x128xf32>
    %cst_29 = arith.constant 1.000000e+00 : f32
    %121 = vector.broadcast %cst_29 : f32 to vector<1x128xf32>
    %122 = arith.subf %120, %121 : vector<1x128xf32>
    %cst_30 = arith.constant 0.000000e+00 : f32
    %123 = vector.broadcast %cst_30 : f32 to vector<1x128xf32>
    %124 = arith.cmpf oeq, %122, %123 : vector<1x128xf32>
    %cst_31 = arith.constant 1.000000e+00 : f32
    %125 = vector.broadcast %cst_31 : f32 to vector<1x128xf32>
    %126 = arith.select %124, %125, %122 : vector<1x128xi1>, vector<1x128xf32>
    %cst_32 = arith.constant 0.000000e+00 : f32
    %127 = vector.broadcast %cst_32 : f32 to vector<1x128xf32>
    %128 = arith.cmpf oeq, %122, %127 : vector<1x128xf32>
    %129 = math.log %120 : vector<1x128xf32>
    %130 = arith.divf %118, %126 : vector<1x128xf32>
    %131 = arith.mulf %129, %130 : vector<1x128xf32>
    %132 = arith.select %128, %118, %131 : vector<1x128xi1>, vector<1x128xf32>
    %cst_33 = arith.constant 0.000000e+00 : f32
    %133 = vector.broadcast %cst_33 : f32 to vector<1x128xf32>
    %134 = arith.maximumf %6, %133 : vector<1x128xf32>
    %135 = arith.mulf %6, %7 : vector<1x128xf32>
    %136 = arith.subf %134, %135 : vector<1x128xf32>
    %137 = arith.addf %136, %132 : vector<1x128xf32>
    %cst_34 = arith.constant 0.000000e+00 : f32
    %138 = vector.broadcast %cst_34 : f32 to vector<1x128xf32>
    %139 = arith.cmpf ogt, %6, %138 : vector<1x128xf32>
    %140 = arith.extui %139 : vector<1x128xi1> to vector<1x128xi32>
    %141 = arith.sitofp %140 : vector<1x128xi32> to vector<1x128xf32>
    %142 = arith.cmpf oeq, %141, %7 : vector<1x128xf32>
    %143 = arith.extui %142 : vector<1x128xi1> to vector<1x128xi32>
    %144 = arith.sitofp %143 : vector<1x128xi32> to vector<1x128xf32>
    %145 = arith.mulf %36, %18 : vector<1x128xf32>
    %146 = arith.mulf %45, %18 : vector<1x128xf32>
    %147 = arith.mulf %137, %104 : vector<1x128xf32>
    %148 = arith.mulf %144, %104 : vector<1x128xf32>
    %149 = arith.mulf %63, %114 : vector<1x128xf32>
    %150 = arith.mulf %72, %114 : vector<1x128xf32>
    %151 = arith.mulf %90, %109 : vector<1x128xf32>
    %152 = arith.mulf %99, %109 : vector<1x128xf32>
    %153 = arith.mulf %104, %144 : vector<1x128xf32>
    %154 = arith.mulf %114, %72 : vector<1x128xf32>
    %155 = arith.addf %153, %154 : vector<1x128xf32>
    %156 = arith.mulf %109, %99 : vector<1x128xf32>
    %157 = arith.addf %155, %156 : vector<1x128xf32>
    %158 = arith.mulf %45, %157 : vector<1x128xf32>
    %159 = tpu.concatenate %145, %146, %104, %114, %109, %147, %148, %149, %150, %151, %152, %158 in 0 : vector<1x128xf32>, vector<1x128xf32>, vector<1x128xf32>, vector<1x128xf32>, vector<1x128xf32>, vector<1x128xf32>, vector<1x128xf32>, vector<1x128xf32>, vector<1x128xf32>, vector<1x128xf32>, vector<1x128xf32>, vector<1x128xf32> -> vector<12x128xf32>
    %c0_35 = arith.constant 0 : index
    %c0_36 = arith.constant 0 : index
    %160 = vector.load %arg7[%c0_35, %c0_36] : memref<12x128xf32, #tpu.memory_space<vmem>>, vector<12x128xf32>
    %161 = arith.addf %160, %159 : vector<12x128xf32>
    %c0_37 = arith.constant 0 : index
    %c0_38 = arith.constant 0 : index
    %162 = vector.load %arg7[%c0_37, %c0_38] : memref<12x128xf32, #tpu.memory_space<vmem>>, vector<12x128xf32>
    tpu.vector_store %arg7[%c0_37, %c0_38], %161 {strides = array<i32>} : memref<12x128xf32, #tpu.memory_space<vmem>>, vector<12x128xf32>,
    %c0_i32_39 = arith.constant 0 : i32
    %163 = arith.cmpi eq, %arg0, %c0_i32_39 : i32
    %164 = arith.extui %163 : i1 to i32
    %c0_i32_40 = arith.constant 0 : i32
    %165 = arith.cmpi ne, %164, %c0_i32_40 : i32
    scf.if %165 {
      %c0_41 = arith.constant 0 : index
      %c0_42 = arith.constant 0 : index
      %166 = vector.load %arg7[%c0_41, %c0_42] : memref<12x128xf32, #tpu.memory_space<vmem>>, vector<12x128xf32>
      %cst_43 = arith.constant dense<0.000000e+00> : vector<12xf32>
      %167 = vector.multi_reduction <add>, %166, %cst_43 [1] : vector<12x128xf32> to vector<12xf32>
      %168 = vector.shape_cast %167 : vector<12xf32> to vector<12x1xf32>
      %cst_44 = arith.constant 1.000000e+00 : f32
      %169 = vector.broadcast %cst_44 : f32 to vector<1x1xf32>
      %170 = vector.extract_strided_slice %168 {offsets = [2, 0], sizes = [1, 1], strides = [1, 1]} : vector<12x1xf32> to vector<1x1xf32>
      %171 = vector.extract_strided_slice %168 {offsets = [3, 0], sizes = [1, 1], strides = [1, 1]} : vector<12x1xf32> to vector<1x1xf32>
      %172 = vector.extract_strided_slice %168 {offsets = [4, 0], sizes = [1, 1], strides = [1, 1]} : vector<12x1xf32> to vector<1x1xf32>
      %cst_45 = arith.constant 0.000000e+00 : f32
      %173 = vector.broadcast %cst_45 : f32 to vector<1x1xf32>
      %174 = arith.cmpf ogt, %170, %173 : vector<1x1xf32>
      %175 = arith.select %174, %170, %169 : vector<1x1xi1>, vector<1x1xf32>
      %cst_46 = arith.constant 0.000000e+00 : f32
      %176 = vector.broadcast %cst_46 : f32 to vector<1x1xf32>
      %177 = arith.cmpf ogt, %171, %176 : vector<1x1xf32>
      %178 = arith.select %177, %171, %169 : vector<1x1xi1>, vector<1x1xf32>
      %cst_47 = arith.constant 0.000000e+00 : f32
      %179 = vector.broadcast %cst_47 : f32 to vector<1x1xf32>
      %180 = arith.cmpf ogt, %172, %179 : vector<1x1xf32>
      %181 = arith.select %180, %172, %169 : vector<1x1xi1>, vector<1x1xf32>
      %182 = vector.extract_strided_slice %168 {offsets = [0, 0], sizes = [1, 1], strides = [1, 1]} : vector<12x1xf32> to vector<1x1xf32>
      %cst_48 = arith.constant 1.250000e-01 : f32
      %183 = vector.broadcast %cst_48 : f32 to vector<1x1xf32>
      %184 = arith.mulf %182, %183 : vector<1x1xf32>
      %185 = vector.extract_strided_slice %168 {offsets = [1, 0], sizes = [1, 1], strides = [1, 1]} : vector<12x1xf32> to vector<1x1xf32>
      %cst_49 = arith.constant 1.250000e-01 : f32
      %186 = vector.broadcast %cst_49 : f32 to vector<1x1xf32>
      %187 = arith.mulf %185, %186 : vector<1x1xf32>
      %188 = vector.extract_strided_slice %168 {offsets = [5, 0], sizes = [1, 1], strides = [1, 1]} : vector<12x1xf32> to vector<1x1xf32>
      %189 = arith.divf %188, %175 : vector<1x1xf32>
      %cst_50 = arith.constant 0.000000e+00 : f32
      %190 = vector.broadcast %cst_50 : f32 to vector<1x1xf32>
      %191 = arith.cmpf ogt, %170, %190 : vector<1x1xf32>
      %192 = vector.extract_strided_slice %168 {offsets = [6, 0], sizes = [1, 1], strides = [1, 1]} : vector<12x1xf32> to vector<1x1xf32>
      %193 = arith.divf %192, %175 : vector<1x1xf32>
      %194 = arith.select %191, %193, %169 : vector<1x1xi1>, vector<1x1xf32>
      %195 = vector.extract_strided_slice %168 {offsets = [7, 0], sizes = [1, 1], strides = [1, 1]} : vector<12x1xf32> to vector<1x1xf32>
      %196 = arith.divf %195, %178 : vector<1x1xf32>
      %cst_51 = arith.constant 0.000000e+00 : f32
      %197 = vector.broadcast %cst_51 : f32 to vector<1x1xf32>
      %198 = arith.cmpf ogt, %171, %197 : vector<1x1xf32>
      %199 = vector.extract_strided_slice %168 {offsets = [8, 0], sizes = [1, 1], strides = [1, 1]} : vector<12x1xf32> to vector<1x1xf32>
      %200 = arith.divf %199, %178 : vector<1x1xf32>
      %201 = arith.select %198, %200, %169 : vector<1x1xi1>, vector<1x1xf32>
      %202 = vector.extract_strided_slice %168 {offsets = [9, 0], sizes = [1, 1], strides = [1, 1]} : vector<12x1xf32> to vector<1x1xf32>
      %203 = arith.divf %202, %181 : vector<1x1xf32>
      %cst_52 = arith.constant 0.000000e+00 : f32
      %204 = vector.broadcast %cst_52 : f32 to vector<1x1xf32>
      %205 = arith.cmpf ogt, %172, %204 : vector<1x1xf32>
      %206 = vector.extract_strided_slice %168 {offsets = [10, 0], sizes = [1, 1], strides = [1, 1]} : vector<12x1xf32> to vector<1x1xf32>
      %207 = arith.divf %206, %181 : vector<1x1xf32>
      %208 = arith.select %205, %207, %169 : vector<1x1xi1>, vector<1x1xf32>
      %209 = vector.extract_strided_slice %168 {offsets = [11, 0], sizes = [1, 1], strides = [1, 1]} : vector<12x1xf32> to vector<1x1xf32>
      %cst_53 = arith.constant 1.250000e-01 : f32
      %210 = vector.broadcast %cst_53 : f32 to vector<1x1xf32>
      %211 = arith.mulf %209, %210 : vector<1x1xf32>
      %212 = tpu.concatenate %184, %187, %189, %194, %196, %201, %203, %208, %211 in 1 : vector<1x1xf32>, vector<1x1xf32>, vector<1x1xf32>, vector<1x1xf32>, vector<1x1xf32>, vector<1x1xf32>, vector<1x1xf32>, vector<1x1xf32>, vector<1x1xf32> -> vector<1x9xf32>
      %c0_54 = arith.constant 0 : index
      %c0_55 = arith.constant 0 : index
      %213 = vector.load %arg6[%c0_54, %c0_55] : memref<1x9xf32, #tpu.memory_space<vmem>>, vector<1x9xf32>
      tpu.vector_store %arg6[%c0_54, %c0_55], %212 {strides = array<i32>} : memref<1x9xf32, #tpu.memory_space<vmem>>, vector<1x9xf32>,
    } else {
    }
    return
  }
  func.func @transform_0(%arg0: i32) -> (i32, i32) {
    %c0_i32 = arith.constant 0 : i32
    %c0_i32_0 = arith.constant 0 : i32
    return %c0_i32, %arg0 : i32, i32
  }
  func.func @transform_1(%arg0: i32) -> (i32, i32) {
    %c0_i32 = arith.constant 0 : i32
    %c0_i32_0 = arith.constant 0 : i32
    return %c0_i32, %arg0 : i32, i32
  }
  func.func @transform_2(%arg0: i32) -> (i32, i32) {
    %c0_i32 = arith.constant 0 : i32
    %c0_i32_0 = arith.constant 0 : i32
    return %c0_i32, %arg0 : i32, i32
  }
  func.func @transform_3(%arg0: i32) -> (i32, i32) {
    %c0_i32 = arith.constant 0 : i32
    %c0_i32_0 = arith.constant 0 : i32
    return %c0_i32, %arg0 : i32, i32
  }
  func.func @transform_4(%arg0: i32) -> (i32, i32) {
    %c0_i32 = arith.constant 0 : i32
    %c0_i32_0 = arith.constant 0 : i32
    return %c0_i32, %arg0 : i32, i32
  }
  func.func @transform_5(%arg0: i32) -> (i32, i32) {
    %c0_i32 = arith.constant 0 : i32
    %c0_i32_0 = arith.constant 0 : i32
    %c0_i32_1 = arith.constant 0 : i32
    return %c0_i32, %c0_i32_0 : i32, i32
  }
}

</mosaic_0001>

<llo_original>
// kernel: tpu_custom_call.1
$region0: #{tpu_custom_call.1}
  #allocation0 [shape = 'u32[]', space=smem, size = 0x4, offset = 0x4, fixed_abs, tag = 'smem constant byte address 0x4 - core index']
  #allocation1 [shape = 'u32[72,128]{1,0:T(1,128)}', space=vmem, size = 0x9000, scoped, tag = 'internal scratch']
  #allocation2 [shape = 'f32[12,128]{1,0:T(8,128)}', space=vmem, size = 0x2000, scoped, tag = 'scratch operand']
  %s0 = inlined_call_operand.hbm [shape: f32[3,128], index: 0, kind: input, shape index: {}]
  %s1 = inlined_call_operand.hbm [shape: f32[16,128], index: 1, kind: input, shape index: {}]
  %s2 = inlined_call_operand.hbm [shape: f32[16,128], index: 2, kind: input, shape index: {}]
  %s3 = inlined_call_operand.vmem [shape: f32[2,128], index: 3, kind: input, shape index: {}]
  %s4 = inlined_call_operand.hbm [shape: s32[3,128], index: 4, kind: input, shape index: {}]
  %s5 = inlined_call_operand.hbm [shape: f32[1,9], index: 5, kind: output, shape index: {}]
  %s6 = sld [smem:[#allocation0]]
  $region54: #{tpu_custom_call.1} parent=0
    _
  %s8 = ssub.s32 1, %s6
  %s9 = scalar_select 0, %s8, %s6
  $region1: #{tpu_custom_call.1} parent=0
    #allocation3 [shape = 'u8[2048]{0}', space=vmem, size = 0x800, scoped, tag = 'input window, operand 0, single buffered']
    #allocation4 [shape = 's32[1]{0}', space=sflag, size = 0x4, scoped, tag = 'scoped memory for tpu_custom_call.1']
    #allocation5 [shape = 's32[1]{0}', space=sflag, size = 0x4, scoped, tag = 'scoped memory for tpu_custom_call.1']
    #allocation6 [shape = 'u8[8192]{0}', space=vmem, size = 0x2000, scoped, tag = 'input window, operand 1, single buffered']
    #allocation7 [shape = 's32[1]{0}', space=sflag, size = 0x4, scoped, tag = 'scoped memory for tpu_custom_call.1']
    #allocation8 [shape = 'u8[8192]{0}', space=vmem, size = 0x2000, scoped, tag = 'input window, operand 2, single buffered']
    #allocation9 [shape = 'u8[2048]{0}', space=vmem, size = 0x800, scoped, tag = 'input window, operand 4, single buffered']
    #allocation10 [shape = 's32[1]{0}', space=sflag, size = 0x4, scoped, tag = 'scoped memory for tpu_custom_call.1']
    #allocation11 [shape = 'u8[512]{0}', space=vmem, size = 0x400, scoped, tag = 'output window, operand 0, single buffered']
    %10 = vsyncpa [#allocation4], 0
    %11 = vsyncpa [#allocation7], 0
    %12 = vsyncpa [#allocation10], 0
    %13 = vsyncpa [#allocation5], 0
    // Predicated region
    $region2: #{tpu_custom_call.1} parent=1 // pred_check
      _
    $region3: #{tpu_custom_call.1} parent=1 // pred_check_branch
      %15 = sbr.rel (0) target = $region5
    $region4: #{tpu_custom_call.1} parent=1 // pred_region
      %17 = vsyncadd [#allocation4], 0
      %s19 = sshll.u32 %s0, 4
      %s20 = int_to_ptr.hbm [resolvable:$true] %s19
      %s21 = sshll.u32 [#allocation3], 4
      %s22 = int_to_ptr.vmem [resolvable:$true] %s21
      %24 = dma.hbm_to_vmem [thread:$0]  %s20, 64, %s22, [#allocation4]
    $region5: #{tpu_custom_call.1} parent=1 // pred_fallthru
      _
    // Predicated region
    $region6: #{tpu_custom_call.1} parent=1 // pred_check
      _
    $region7: #{tpu_custom_call.1} parent=1 // pred_check_branch
      %26 = sbr.rel (0) target = $region9
    $region8: #{tpu_custom_call.1} parent=1 // pred_region
      %28 = vsyncadd [#allocation7], 0
      %s29 = sshll.u32 %s1, 4
      %s30 = int_to_ptr.hbm [resolvable:$true] %s29
      %s31 = sshll.u32 [#allocation6], 4
      %s32 = int_to_ptr.vmem [resolvable:$true] %s31
      %37 = dma.hbm_to_vmem [thread:$0]  %s30, 256, %s32, [#allocation7], 128, 128, 8
    $region9: #{tpu_custom_call.1} parent=1 // pred_fallthru
      _
    // Predicated region
    $region10: #{tpu_custom_call.1} parent=1 // pred_check
      _
    $region11: #{tpu_custom_call.1} parent=1 // pred_check_branch
      %39 = sbr.rel (0) target = $region13
    $region12: #{tpu_custom_call.1} parent=1 // pred_region
      %41 = vsyncadd [#allocation7], 0
      %s42 = sshll.u32 %s2, 4
      %s43 = int_to_ptr.hbm [resolvable:$true] %s42
      %s44 = sshll.u32 [#allocation8], 4
      %s45 = int_to_ptr.vmem [resolvable:$true] %s44
      %50 = dma.hbm_to_vmem [thread:$0]  %s43, 256, %s45, [#allocation7], 128, 128, 8
    $region13: #{tpu_custom_call.1} parent=1 // pred_fallthru
      _
    // Predicated region
    $region14: #{tpu_custom_call.1} parent=1 // pred_check
      _
    $region15: #{tpu_custom_call.1} parent=1 // pred_check_branch
      %52 = sbr.rel (0) target = $region17
    $region16: #{tpu_custom_call.1} parent=1 // pred_region
      _
    $region17: #{tpu_custom_call.1} parent=1 // pred_fallthru
      _
    // Predicated region
    $region18: #{tpu_custom_call.1} parent=1 // pred_check
      _
    $region19: #{tpu_custom_call.1} parent=1 // pred_check_branch
      %54 = sbr.rel (0) target = $region21
    $region20: #{tpu_custom_call.1} parent=1 // pred_region
      %56 = vsyncadd [#allocation10], 0
      %s58 = sshll.u32 %s4, 4
      %s59 = int_to_ptr.hbm [resolvable:$true] %s58
      %s60 = sshll.u32 [#allocation9], 4
      %s61 = int_to_ptr.vmem [resolvable:$true] %s60
      %63 = dma.hbm_to_vmem [thread:$0]  %s59, 64, %s61, [#allocation10]
    $region21: #{tpu_custom_call.1} parent=1 // pred_fallthru
      _
    // Predicated region
    $region22: #{tpu_custom_call.1} parent=1 // pred_check
      _
    $region23: #{tpu_custom_call.1} parent=1 // pred_check_branch
      %65 = sbr.rel (0) target = $region25
    $region24: #{tpu_custom_call.1} parent=1 // pred_region
      %67 = dma.done [#allocation4], 64
    $region25: #{tpu_custom_call.1} parent=1 // pred_fallthru
      _
    // Predicated region
    $region26: #{tpu_custom_call.1} parent=1 // pred_check
      _
    $region27: #{tpu_custom_call.1} parent=1 // pred_check_branch
      %69 = sbr.rel (0) target = $region29
    $region28: #{tpu_custom_call.1} parent=1 // pred_region
      %71 = dma.done [#allocation7], 256
    $region29: #{tpu_custom_call.1} parent=1 // pred_fallthru
      _
    // Predicated region
    $region30: #{tpu_custom_call.1} parent=1 // pred_check
      _
    $region31: #{tpu_custom_call.1} parent=1 // pred_check_branch
      %73 = sbr.rel (0) target = $region33
    $region32: #{tpu_custom_call.1} parent=1 // pred_region
      %75 = dma.done [#allocation7], 256
    $region33: #{tpu_custom_call.1} parent=1 // pred_fallthru
      _
    // Predicated region
    $region34: #{tpu_custom_call.1} parent=1 // pred_check
      _
    $region35: #{tpu_custom_call.1} parent=1 // pred_check_branch
      %77 = sbr.rel (0) target = $region37
    $region36: #{tpu_custom_call.1} parent=1 // pred_region
      %79 = dma.done [#allocation10], 64
    $region37: #{tpu_custom_call.1} parent=1 // pred_fallthru
      _
    %p80 = scmp.eq.s32.totalorder 0, 0
    // Predicated region
    $region38: #{tpu_custom_call.1} parent=1 // pred_check
      %p81 = pneg %p80
    $region39: #{tpu_custom_call.1} parent=1 // pred_check_branch
      %83 = sbr.rel (%p81) target = $region41
    $region40: #{tpu_custom_call.1} parent=1 // pred_region
      %84 = vst [vmem:[#allocation2] sm:$0xff] 0.0
      %85 = vst [vmem:[#allocation2 + $0x8] sm:$0xf] 0.0
    $region41: #{tpu_custom_call.1} parent=1 // pred_fallthru
      _
    %v86 = vld [vmem:[#allocation3] sm:$0x7]
    %v87 = vld [vmem:[#allocation6] sm:$0xff]
    %v88 = vld [vmem:[#allocation6 + $0x8] sm:$0xff]
    %v89 = vld [vmem:[#allocation8] sm:$0xff]
    %v90 = vld [vmem:[#allocation8 + $0x8] sm:$0xff]
    %v91 = vld [vmem:[%s3] sm:$0x1]
    %v92 = vld [vmem:[%s3 + $0x1] sm:$0x1]
    %v93 = vld [vmem:[#allocation9] sm:$0x1]
    %v94 = vld [vmem:[#allocation9 + $0x1] sm:$0x1]
    %v95 = vld [vmem:[#allocation9 + $0x2] sm:$0x1]
    %v96 = vlaneseq
    %v97 = vand.u32 %v96, 127
    %s98 = smul.u32 0, 128
    %v99 = vstv %s98
    %v100 = vadd.s32 %v99, %v97
    %vm101 = vcmp.lt.s32.totalorder %v100, 8
    %v102 = vsel %vm101, 1, 0
    %v103 = vcvt.s32.f32 %v102
    %vm104 = vcmask 1042432
    %v105 = vsel %vm104, %v86, -inf
    %v106 = vrot.slane %v105, 4
    %v107 = vmax.f32 %v105, %v106
    %v108 = vrot.slane %v107, 2
    %v109 = vmax.f32 %v107, %v108
    %v110 = vrot.slane %v109, 1
    %v111 = vmax.f32 %v109, %v110
    %v112 = vsub.f32 %v86, %v111
    %v113 = vmul.f32 %v112, 1.442695
    %v114 = vpow.pop %v113
    %v115 = vsel %vm104, %v114, 0.0
    %v116 = vrot.slane %v115, 4
    %v117 = vadd.f32 %v115, %v116
    %v118 = vrot.slane %v117, 2
    %v119 = vadd.f32 %v117, %v118
    %v120 = vrot.slane %v119, 1
    %v121 = vadd.f32 %v119, %v120
    %v122 = vlog2.pop %v121
    %v123 = vmul.f32 %v122, 0.6931472
    %v124 = vadd.f32 %v111, %v123
    %v125 = vlaneseq
    %v126 = vshrl.u32 %v125, 7
    %v127 = vperm.slane %v93, 0
    %vm128 = vcmp.eq.s32.totalorder %v126, %v127
    %v129 = vsel %vm128, 1, 0
    %v130 = vcvt.s32.f32 %v129
    %v131 = vmul.f32 %v86, %v130
    %v132 = vsel %vm104, %v131, 0.0
    %v133 = vrot.slane %v132, 4
    %v134 = vadd.f32 %v132, %v133
    %v135 = vrot.slane %v134, 2
    %v136 = vadd.f32 %v134, %v135
    %v137 = vrot.slane %v136, 1
    %v138 = vadd.f32 %v136, %v137
    %v139 = vsub.f32 %v124, %v138
    %vm140 = vcmp.ge.f32.partialorder %v86, %v111
    %v141 = vsel %vm140, %v126, 3
    %v142 = vsel %vm104, %v141, 2147483647
    %v143 = vrot.slane %v142, 4
    %vm144 = vcmp.lt.s32.totalorder %v142, %v143
    %v145 = vsel %vm144, %v142, %v143
    %v146 = vrot.slane %v145, 2
    %vm147 = vcmp.lt.s32.totalorder %v145, %v146
    %v148 = vsel %vm147, %v145, %v146
    %v149 = vrot.slane %v148, 1
    %vm150 = vcmp.lt.s32.totalorder %v148, %v149
    %v151 = vsel %vm150, %v148, %v149
    %vm152 = vcmp.eq.s32.totalorder %v151, %v93
    %v153 = vsel %vm152, 1, 0
    %v154 = vcvt.s32.f32 %v153
    %v155 = vmax.f32 %v87, %v88
    %v156 = vrot.slane %v155, 4
    %v157 = vmax.f32 %v155, %v156
    %v158 = vrot.slane %v157, 2
    %v159 = vmax.f32 %v157, %v158
    %v160 = vrot.slane %v159, 1
    %v161 = vmax.f32 %v159, %v160
    %v162 = vsub.f32 %v87, %v161
    %v163 = vsub.f32 %v88, %v161
    %v164 = vmul.f32 %v162, 1.442695
    %v165 = vpow.pop %v164
    %v166 = vmul.f32 %v163, 1.442695
    %v167 = vpow.pop %v166
    %v168 = vadd.f32 %v165, %v167
    %v169 = vrot.slane %v168, 4
    %v170 = vadd.f32 %v168, %v169
    %v171 = vrot.slane %v170, 2
    %v172 = vadd.f32 %v170, %v171
    %v173 = vrot.slane %v172, 1
    %v174 = vadd.f32 %v172, %v173
    %v175 = vlog2.pop %v174
    %v176 = vmul.f32 %v175, 0.6931472
    %v177 = vadd.f32 %v161, %v176
    %v178 = vadd.s32 %v126, 8
    %v179 = vperm.slane %v94, 0
    %vm180 = vcmp.eq.s32.totalorder %v126, %v179
    %vm181 = vcmp.eq.s32.totalorder %v178, %v179
    %v182 = vsel %vm180, 1, 0
    %v183 = vsel %vm181, 1, 0
    %v184 = vcvt.s32.f32 %v182
    %v185 = vcvt.s32.f32 %v183
    %v186 = vmul.f32 %v87, %v184
    %v187 = vmul.f32 %v88, %v185
    %v188 = vadd.f32 %v186, %v187
    %v189 = vrot.slane %v188, 4
    %v190 = vadd.f32 %v188, %v189
    %v191 = vrot.slane %v190, 2
    %v192 = vadd.f32 %v190, %v191
    %v193 = vrot.slane %v192, 1
    %v194 = vadd.f32 %v192, %v193
    %v195 = vsub.f32 %v177, %v194
    %vm196 = vcmp.ge.f32.partialorder %v87, %v161
    %vm197 = vcmp.ge.f32.partialorder %v88, %v161
    %v198 = vsel %vm196, %v126, 16
    %v199 = vsel %vm197, %v178, 16
    %vm200 = vcmp.lt.s32.totalorder %v198, %v199
    %v201 = vsel %vm200, %v198, %v199
    %v202 = vrot.slane %v201, 4
    %vm203 = vcmp.lt.s32.totalorder %v201, %v202
    %v204 = vsel %vm203, %v201, %v202
    %v205 = vrot.slane %v204, 2
    %vm206 = vcmp.lt.s32.totalorder %v204, %v205
    %v207 = vsel %vm206, %v204, %v205
    %v208 = vrot.slane %v207, 1
    %vm209 = vcmp.lt.s32.totalorder %v207, %v208
    %v210 = vsel %vm209, %v207, %v208
    %vm211 = vcmp.eq.s32.totalorder %v210, %v94
    %v212 = vsel %vm211, 1, 0
    %v213 = vcvt.s32.f32 %v212
    %v214 = vmax.f32 %v89, %v90
    %v215 = vrot.slane %v214, 4
    %v216 = vmax.f32 %v214, %v215
    %v217 = vrot.slane %v216, 2
    %v218 = vmax.f32 %v216, %v217
    %v219 = vrot.slane %v218, 1
    %v220 = vmax.f32 %v218, %v219
    %v221 = vsub.f32 %v89, %v220
    %v222 = vsub.f32 %v90, %v220
    %v223 = vmul.f32 %v221, 1.442695
    %v224 = vpow.pop %v223
    %v225 = vmul.f32 %v222, 1.442695
    %v226 = vpow.pop %v225
    %v227 = vadd.f32 %v224, %v226
    %v228 = vrot.slane %v227, 4
    %v229 = vadd.f32 %v227, %v228
    %v230 = vrot.slane %v229, 2
    %v231 = vadd.f32 %v229, %v230
    %v232 = vrot.slane %v231, 1
    %v233 = vadd.f32 %v231, %v232
    %v234 = vlog2.pop %v233
    %v235 = vmul.f32 %v234, 0.6931472
    %v236 = vadd.f32 %v220, %v235
    %v237 = vperm.slane %v95, 0
    %vm238 = vcmp.eq.s32.totalorder %v126, %v237
    %vm239 = vcmp.eq.s32.totalorder %v178, %v237
    %v240 = vsel %vm238, 1, 0
    %v241 = vsel %vm239, 1, 0
    %v242 = vcvt.s32.f32 %v240
    %v243 = vcvt.s32.f32 %v241
    %v244 = vmul.f32 %v89, %v242
    %v245 = vmul.f32 %v90, %v243
    %v246 = vadd.f32 %v244, %v245
    %v247 = vrot.slane %v246, 4
    %v248 = vadd.f32 %v246, %v247
    %v249 = vrot.slane %v248, 2
    %v250 = vadd.f32 %v248, %v249
    %v251 = vrot.slane %v250, 1
    %v252 = vadd.f32 %v250, %v251
    %v253 = vsub.f32 %v236, %v252
    %vm254 = vcmp.ge.f32.partialorder %v89, %v220
    %vm255 = vcmp.ge.f32.partialorder %v90, %v220
    %v256 = vsel %vm254, %v126, 16
    %v257 = vsel %vm255, %v178, 16
    %vm258 = vcmp.lt.s32.totalorder %v256, %v257
    %v259 = vsel %vm258, %v256, %v257
    %v260 = vrot.slane %v259, 4
    %vm261 = vcmp.lt.s32.totalorder %v259, %v260
    %v262 = vsel %vm261, %v259, %v260
    %v263 = vrot.slane %v262, 2
    %vm264 = vcmp.lt.s32.totalorder %v262, %v263
    %v265 = vsel %vm264, %v262, %v263
    %v266 = vrot.slane %v265, 1
    %vm267 = vcmp.lt.s32.totalorder %v265, %v266
    %v268 = vsel %vm267, %v265, %v266
    %vm269 = vcmp.eq.s32.totalorder %v268, %v95
    %v270 = vsel %vm269, 1, 0
    %v271 = vcvt.s32.f32 %v270
    %vm272 = vcmp.eq.s32.totalorder %v93, 0
    %v273 = vsel %vm272, 1, 0
    %v274 = vcvt.s32.f32 %v273
    %v275 = vmul.f32 %v274, %v103
    %vm276 = vcmp.eq.s32.totalorder %v93, 1
    %v277 = vsel %vm276, 1, 0
    %v278 = vcvt.s32.f32 %v277
    %v279 = vmul.f32 %v278, %v103
    %vm280 = vcmp.eq.s32.totalorder %v93, 2
    %v281 = vsel %vm280, 1, 0
    %v282 = vcvt.s32.f32 %v281
    %v283 = vmul.f32 %v282, %v103
    %v284 = vand.u32 2147483647, %v91
    %v285 = vsub.f32 0.0, %v284
    %v286 = vmul.f32 %v285, 1.442695
    %v287 = vpow.pop %v286
    %v288 = vadd.f32 %v287, 1.0
    %v289 = vsub.f32 %v288, 1.0
    %vm290 = vcmp.eq.f32.partialorder %v289, 0.0
    %v291 = vsel %vm290, 1.0, %v289
    %v292 = vlog2.pop %v288
    %v293 = vmul.f32 %v292, 0.6931472
    %v294 = vrcp.pop %v291
    %v295 = vmul.f32 %v291, %v294
    %v296 = vsub.f32 1.0, %v295
    %v297 = vmul.f32 %v294, %v296
    %v298 = vadd.f32 %v294, %v297
    %vm299 = vweird.f32 %v291
    %vm300 = vweird.f32 %v294
    %vm301 = vmor %vm299, %vm300
    %v302 = vsel %vm301, %v294, %v298
    %v303 = vand.u32 2147483647, %v291
    %vm304 = vcmp.eq.f32.partialorder %v303, 8.507059e+37
    %v305 = vand.u32 %v291, 2147483648
    %v306 = vor.u32 1.1754944e-38, %v305
    %v307 = vsel %vm304, %v306, %v302
    %v308 = vmul.f32 %v287, %v307
    %v309 = vmul.f32 %v293, %v308
    %v310 = vsel %vm290, %v287, %v309
    %v311 = vmax.f32 %v91, 0.0
    %v312 = vmul.f32 %v91, %v92
    %v313 = vsub.f32 %v311, %v312
    %v314 = vadd.f32 %v313, %v310
    %vm315 = vcmp.gt.f32.partialorder %v91, 0.0
    %v316 = vsel %vm315, 1, 0
    %v317 = vcvt.s32.f32 %v316
    %vm318 = vcmp.eq.f32.partialorder %v317, %v92
    %v319 = vsel %vm318, 1, 0
    %v320 = vcvt.s32.f32 %v319
    %v321 = vmul.f32 %v139, %v103
    %v322 = vmul.f32 %v154, %v103
    %v323 = vmul.f32 %v314, %v275
    %v324 = vmul.f32 %v320, %v275
    %v325 = vmul.f32 %v195, %v283
    %v326 = vmul.f32 %v213, %v283
    %v327 = vmul.f32 %v253, %v279
    %v328 = vmul.f32 %v271, %v279
    %v329 = vadd.f32 %v324, %v326
    %v330 = vadd.f32 %v329, %v328
    %v331 = vmul.f32 %v154, %v330
    %v333 = vrot.slane %v322, 7
    %v336 = vrot.slane %v275, 6
    %v339 = vrot.slane %v283, 5
    %v342 = vrot.slane %v279, 4
    %v345 = vrot.slane %v323, 3
    %v348 = vrot.slane %v324, 2
    %v351 = vrot.slane %v325, 1
    %v354 = vrot.slane %v327, 7
    %v357 = vrot.slane %v328, 6
    %v360 = vrot.slane %v331, 5
    %vm362 = vcmask 1040384
    %v363 = vsel %vm362, %v321, %v333
    %vm364 = vcmask 1041408
    %v365 = vsel %vm364, %v363, %v336
    %v366 = vsel %vm104, %v365, %v339
    %vm367 = vcmask 1043456
    %v368 = vsel %vm367, %v366, %v342
    %vm369 = vcmask 1044480
    %v370 = vsel %vm369, %v368, %v345
    %vm371 = vcmask 1045504
    %v372 = vsel %vm371, %v370, %v348
    %vm373 = vcmask 1046528
    %v374 = vsel %vm373, %v372, %v351
    %v375 = vsel %vm362, %v326, %v354
    %v376 = vsel %vm364, %v375, %v357
    %v377 = vsel %vm104, %v376, %v360
    %v378 = vld [vmem:[#allocation2] sm:$0xff]
    %v379 = vld [vmem:[#allocation2 + $0x8] sm:$0xf]
    %v380 = vadd.f32 %v378, %v374
    %v381 = vadd.f32 %v379, %v377
    %382 = vst [vmem:[#allocation2] sm:$0xff] %v380
    %383 = vst [vmem:[#allocation2 + $0x8] sm:$0xf] %v381
    // Predicated region
    $region42: #{tpu_custom_call.1} parent=1 // pred_check
      %p384 = pneg %p80
    $region43: #{tpu_custom_call.1} parent=1 // pred_check_branch
      %386 = sbr.rel (%p384) target = $region45
    $region44: #{tpu_custom_call.1} parent=1 // pred_region
      %v387 = vld [vmem:[#allocation2] sm:$0xff]
      %v388 = vld [vmem:[#allocation2 + $0x8] sm:$0xf]
      %389 = vadd.xlane.f32.xlu0 %v387
      %v390 = vpop.xlane.xlu0 %389
      %v391 = vsel %vm367, %v388, 0.0
      %392 = vadd.xlane.f32.xlu0 %v391
      %v393 = vpop.xlane.xlu0 %392
      %vm394 = vcmp.gt.f32.partialorder %v390, 0.0
      %v395 = vsel %vm394, %v390, 1.0
      %v396 = vmul.f32 %v390, 0.125
      %v398 = vrot.slane %v395, 5
      %v400 = vrcp.pop %v398
      %v401 = vmul.f32 %v398, %v400
      %v402 = vsub.f32 1.0, %v401
      %v403 = vmul.f32 %v400, %v402
      %v404 = vadd.f32 %v400, %v403
      %vm405 = vweird.f32 %v398
      %vm406 = vweird.f32 %v400
      %vm407 = vmor %vm405, %vm406
      %v408 = vsel %vm407, %v400, %v404
      %v409 = vand.u32 2147483647, %v398
      %vm410 = vcmp.eq.f32.partialorder %v409, 8.507059e+37
      %v411 = vand.u32 %v398, 2147483648
      %v412 = vor.u32 1.1754944e-38, %v411
      %v413 = vsel %vm410, %v412, %v408
      %v414 = vmul.f32 %v390, %v413
      %v415 = vrot.slane %v395, 4
      %v417 = vrcp.pop %v415
      %v418 = vmul.f32 %v415, %v417
      %v419 = vsub.f32 1.0, %v418
      %v420 = vmul.f32 %v417, %v419
      %v421 = vadd.f32 %v417, %v420
      %vm422 = vweird.f32 %v415
      %vm423 = vweird.f32 %v417
      %vm424 = vmor %vm422, %vm423
      %v425 = vsel %vm424, %v417, %v421
      %v426 = vand.u32 2147483647, %v415
      %vm427 = vcmp.eq.f32.partialorder %v426, 8.507059e+37
      %v428 = vand.u32 %v415, 2147483648
      %v429 = vor.u32 1.1754944e-38, %v428
      %v430 = vsel %vm427, %v429, %v425
      %v431 = vmul.f32 %v390, %v430
      %v433 = vrot.slane %v431, 4
      %v435 = vsel %vm394, %v433, 1.0
      %v436 = vrot.slane %v395, 3
      %v438 = vrcp.pop %v436
      %v439 = vmul.f32 %v436, %v438
      %v440 = vsub.f32 1.0, %v439
      %v441 = vmul.f32 %v438, %v440
      %v442 = vadd.f32 %v438, %v441
      %vm443 = vweird.f32 %v436
      %vm444 = vweird.f32 %v438
      %vm445 = vmor %vm443, %vm444
      %v446 = vsel %vm445, %v438, %v442
      %v447 = vand.u32 2147483647, %v436
      %vm448 = vcmp.eq.f32.partialorder %v447, 8.507059e+37
      %v449 = vand.u32 %v436, 2147483648
      %v450 = vor.u32 1.1754944e-38, %v449
      %v451 = vsel %vm448, %v450, %v446
      %v452 = vmul.f32 %v393, %v451
      %v454 = vrot.slane %v452, 5
      %v456 = vsel %vm394, %v454, 1.0
      %v457 = vrot.slane %v395, 2
      %v459 = vrcp.pop %v457
      %v460 = vmul.f32 %v457, %v459
      %v461 = vsub.f32 1.0, %v460
      %v462 = vmul.f32 %v459, %v461
      %v463 = vadd.f32 %v459, %v462
      %vm464 = vweird.f32 %v457
      %vm465 = vweird.f32 %v459
      %vm466 = vmor %vm464, %vm465
      %v467 = vsel %vm466, %v459, %v463
      %v468 = vand.u32 2147483647, %v457
      %vm469 = vcmp.eq.f32.partialorder %v468, 8.507059e+37
      %v470 = vand.u32 %v457, 2147483648
      %v471 = vor.u32 1.1754944e-38, %v470
      %v472 = vsel %vm469, %v471, %v467
      %v473 = vmul.f32 %v393, %v472
      %v475 = vrot.slane %v473, 6
      %v477 = vsel %vm394, %v475, 1.0
      %v478 = vmul.f32 %v393, 0.125
      %v480 = vrot.slane %v396, 1
      %v483 = vrot.slane %v414, 5
      %484 = vrot.lane.b32.xlu0 %v483, 2
      %v485 = vpop.permute.xlu0 %484
      %v488 = vrot.slane %v435, 2
      %489 = vrot.lane.b32.xlu0 %v488, 3
      %v490 = vpop.permute.xlu0 %489
      %v492 = vrot.slane %v431, 7
      %493 = vrot.lane.b32.xlu0 %v492, 4
      %v494 = vpop.permute.xlu0 %493
      %v497 = vrot.slane %v456, 3
      %498 = vrot.lane.b32.xlu0 %v497, 5
      %v499 = vpop.permute.xlu0 %498
      %v501 = vrot.slane %v452, 1
      %502 = vrot.lane.b32.xlu0 %v501, 6
      %v503 = vpop.permute.xlu0 %502
      %v506 = vrot.slane %v477, 4
      %507 = vrot.lane.b32.xlu0 %v506, 7
      %v508 = vpop.permute.xlu0 %507
      %v511 = vrot.slane %v478, 3
      %vm513 = vcmask 7168
      %v514 = vsel %vm513, %v396, %v480
      %vm515 = vcmask 15360
      %v516 = vsel %vm515, %v514, %v485
      %vm517 = vcmask 23552
      %v518 = vsel %vm517, %v516, %v490
      %vm519 = vcmask 31744
      %v520 = vsel %vm519, %v518, %v494
      %vm521 = vcmask 39936
      %v522 = vsel %vm521, %v520, %v499
      %vm523 = vcmask 48128
      %v524 = vsel %vm523, %v522, %v503
      %vm525 = vcmask 56320
      %v526 = vsel %vm525, %v524, %v508
      %vm527 = vcmask 64512
      %v528 = vsel %vm527, %v526, %v511
      %vm529 = vcmask 65536
      %530 = vst.msk [vmem:[#allocation11] sm:$0x1] %vm529, %v528
    $region45: #{tpu_custom_call.1} parent=1 // pred_fallthru
      _
    // Predicated region
    $region46: #{tpu_custom_call.1} parent=1 // pred_check
      _
    $region47: #{tpu_custom_call.1} parent=1 // pred_check_branch
      %532 = sbr.rel (0) target = $region49
    $region48: #{tpu_custom_call.1} parent=1 // pred_region
      %534 = vsyncadd [#allocation5], 0
      %s536 = sshll.u32 [#allocation11], 4
      %s537 = int_to_ptr.vmem [resolvable:$true] %s536
      %s538 = sshll.u32 %s5, 4
      %s539 = int_to_ptr.hbm [resolvable:$true] %s538
      %541 = dma.vmem_to_hbm [thread:$0]  %s537, 16, %s539, [#allocation5]
    $region49: #{tpu_custom_call.1} parent=1 // pred_fallthru
      _
    // Predicated region
    $region50: #{tpu_custom_call.1} parent=1 // pred_check
      _
    $region51: #{tpu_custom_call.1} parent=1 // pred_check_branch
      %543 = sbr.rel (0) target = $region53
    $region52: #{tpu_custom_call.1} parent=1 // pred_region
      %545 = dma.done [#allocation5], 16
    $region53: #{tpu_custom_call.1} parent=1 // pred_fallthru
      _
    %546 = vsyncpa [#allocation4], 1
    %547 = vsyncpa [#allocation7], 1
    %548 = vsyncpa [#allocation10], 1
    %549 = vsyncpa [#allocation5], 1

</llo_original>
